<compile_context>
chip_gen: v6e
topology: v6e:2x2x1
jax: 0.10.0
libtpu: 0.0.40
codegen_flags: <defaults>
</compile_context>

<pallas_src>
import functools

import jax
import jax.numpy as jnp
from jax.experimental import pallas as pl
from jax.experimental.pallas import tpu as pltpu

NEG_SLOPE = 0.01  # nn.LeakyReLU default


def _leaky_relu(x):
    return jnp.where(x > 0, x, NEG_SLOPE * x)


def _round_up(n, m):
    return (n + m - 1) // m * m


def encoder_kernel(
    x_ref,
    w1_ref, b1_ref,
    w2_ref, b2_ref,
    w3_ref, b3_ref,
    wh_ref, bh_ref,      # fused mu|logvar head
    out_ref,
    *, compute_dtype,
):
    x = x_ref[...]
    if x.dtype != jnp.dtype(compute_dtype):
        x = x.astype(compute_dtype)

    # encoder[0]: Linear(D, D) + LeakyReLU  (f32 accumulate, f32 elementwise)
    h = jnp.dot(x, w1_ref[...], preferred_element_type=jnp.float32) + b1_ref[...]
    h = _leaky_relu(h)

    # encoder[2]: Linear(D, D) + LeakyReLU
    h = jnp.dot(h.astype(compute_dtype), w2_ref[...],
                preferred_element_type=jnp.float32) + b2_ref[...]
    h = _leaky_relu(h)

    # encoder[4]: Linear(D, L) + LeakyReLU
    h = jnp.dot(h.astype(compute_dtype), w3_ref[...],
                preferred_element_type=jnp.float32) + b3_ref[...]
    h = _leaky_relu(h)

    # fused heads: [mu | logvar] in one lane-dense matmul + store
    out = jnp.dot(h.astype(compute_dtype), wh_ref[...],
                  preferred_element_type=jnp.float32) + bh_ref[...]
    out_ref[...] = out.astype(out_ref.dtype)


def encoder_forward(x, params, *, latent_dim, original_dim,
                    compute_dtype=jnp.float32, batch_block=512):
    """x: (B, original_dim) float32. params: unpadded (in,out) weights, (1,out) biases."""
    B, D = x.shape
    assert D == original_dim

    D_pad = _round_up(original_dim, 128)
    L_pad = _round_up(latent_dim, 128)
    H_pad = 2 * L_pad

    # Batch tile: multiple of 8 sublanes, capped so VMEM stays small even on v7x.
    TB = min(_round_up(B, 8), batch_block)
    B_pad = _round_up(B, TB)

    def pad2(a, rows, cols, dtype):
        a = a.astype(dtype)
        return jnp.pad(a, ((0, rows - a.shape[0]), (0, cols - a.shape[1])))

    wdt = compute_dtype
    x_p = pad2(x, B_pad, D_pad, x.dtype)

    w1 = pad2(params["w1"], D_pad, D_pad, wdt)
    b1 = pad2(params["b1"], 1, D_pad, jnp.float32)
    w2 = pad2(params["w2"], D_pad, D_pad, wdt)
    b2 = pad2(params["b2"], 1, D_pad, jnp.float32)
    w3 = pad2(params["w3"], D_pad, L_pad, wdt)
    b3 = pad2(params["b3"], 1, L_pad, jnp.float32)

    # Fused head: mu occupies columns [0, L), logvar occupies [L_pad, L_pad+L).
    wh = jnp.zeros((L_pad, H_pad), wdt)
    wh = wh.at[:latent_dim, :latent_dim].set(params["wmu"].astype(wdt))
    wh = wh.at[:latent_dim, L_pad:L_pad + latent_dim].set(params["wlv"].astype(wdt))
    bh = jnp.zeros((1, H_pad), jnp.float32)
    bh = bh.at[:, :latent_dim].set(params["bmu"])
    bh = bh.at[:, L_pad:L_pad + latent_dim].set(params["blv"])

    args = (x_p, w1, b1, w2, b2, w3, b3, wh, bh)

    grid = (B_pad // TB,)

    def full_spec(shape):
        return pl.BlockSpec(shape, lambda i: (0, 0))

    in_specs = [
        pl.BlockSpec((TB, D_pad), lambda i: (i, 0)),   # x: tiled over batch
        full_spec((D_pad, D_pad)), full_spec((1, D_pad)),   # w1, b1 (resident)
        full_spec((D_pad, D_pad)), full_spec((1, D_pad)),   # w2, b2
        full_spec((D_pad, L_pad)), full_spec((1, L_pad)),   # w3, b3
        full_spec((L_pad, H_pad)), full_spec((1, H_pad)),   # fused head
    ]
    out_spec = pl.BlockSpec((TB, H_pad), lambda i: (i, 0))

    flops = 2 * B_pad * (D_pad * D_pad + D_pad * D_pad + D_pad * L_pad + L_pad * H_pad)
    bytes_accessed = (sum(a.size * a.dtype.itemsize for a in args)
                      + B_pad * H_pad * 4)
    cost = pl.CostEstimate(flops=flops, transcendentals=0,
                           bytes_accessed=bytes_accessed)

    out = pl.pallas_call(
        functools.partial(encoder_kernel, compute_dtype=compute_dtype),
        out_shape=jax.ShapeDtypeStruct((B_pad, H_pad), jnp.float32),
        grid=grid,
        in_specs=in_specs,
        out_specs=out_spec,
        compiler_params=pltpu.CompilerParams(
            # batch grid is embarrassingly parallel -> shards across v7x's 2 TCs
            dimension_semantics=("parallel",),
        ),
        cost_estimate=cost,
    )(*args)

    mu = out[:B, :latent_dim]
    logvar = out[:B, L_pad:L_pad + latent_dim]
    return mu, logvar


def init_params(key, original_dim, latent_dim):
    """Deterministic init mimicking nn.Linear's uniform(-1/sqrt(in), 1/sqrt(in)).

    Weights stored as (in_dim, out_dim) (transposed vs PyTorch's (out,in)),
    biases as (1, out_dim). Unpadded; padding/fusion happens in the wrapper.
    """
    def linear(k, fan_in, fan_out):
        kw, kb = jax.random.split(k)
        bound = 1.0 / jnp.sqrt(fan_in)
        w = jax.random.uniform(kw, (fan_in, fan_out), jnp.float32, -bound, bound)
        b = jax.random.uniform(kb, (1, fan_out), jnp.float32, -bound, bound)
        return w, b

    k1, k2, k3, k4, k5 = jax.random.split(key, 5)
    w1, b1 = linear(k1, original_dim, original_dim)
    w2, b2 = linear(k2, original_dim, original_dim)
    w3, b3 = linear(k3, original_dim, latent_dim)
    wmu, bmu = linear(k4, latent_dim, latent_dim)
    wlv, blv = linear(k5, latent_dim, latent_dim)
    return dict(
        w1=w1, b1=b1, w2=w2, b2=b2, w3=w3, b3=b3,
        wmu=wmu, bmu=bmu, wlv=wlv, blv=blv,
    )


def encoder_reference(x, params):
    """Pure-JAX reference for correctness checking (unpadded math)."""
    h = _leaky_relu(x @ params["w1"] + params["b1"])
    h = _leaky_relu(h @ params["w2"] + params["b2"])
    h = _leaky_relu(h @ params["w3"] + params["b3"])
    mu = h @ params["wmu"] + params["bmu"]
    logvar = h @ params["wlv"] + params["blv"]
    return mu, logvar


if __name__ == "__main__":
    original_dim = 32
    latent_dim = 16
    batch = 8

    key = jax.random.PRNGKey(0)
    kx, kp = jax.random.split(key)
    x = jax.random.normal(kx, (batch, original_dim), jnp.float32)
    params = init_params(kp, original_dim, latent_dim)

    mu, logvar = encoder_forward(
        x, params, latent_dim=latent_dim, original_dim=original_dim)
    jax.block_until_ready((mu, logvar))

    mu_ref, logvar_ref = encoder_reference(x, params)
    assert mu.shape == (batch, latent_dim)
    assert logvar.shape == (batch, latent_dim)
    assert jnp.allclose(mu, mu_ref, atol=1e-5, rtol=1e-5)
    assert jnp.allclose(logvar, logvar_ref, atol=1e-5, rtol=1e-5)

    print("KERNEL_OK")
</pallas_src>

<mosaic_0001>
module attributes {stable_mosaic.version = 11 : i64} {
  func.func @encoder_kernel(%arg0: i32, %arg1: memref<8x128xf32, #tpu.memory_space<vmem>>, %arg2: memref<128x128xf32, #tpu.memory_space<vmem>>, %arg3: memref<1x128xf32, #tpu.memory_space<vmem>>, %arg4: memref<128x128xf32, #tpu.memory_space<vmem>>, %arg5: memref<1x128xf32, #tpu.memory_space<vmem>>, %arg6: memref<128x128xf32, #tpu.memory_space<vmem>>, %arg7: memref<1x128xf32, #tpu.memory_space<vmem>>, %arg8: memref<128x256xf32, #tpu.memory_space<vmem>>, %arg9: memref<1x256xf32, #tpu.memory_space<vmem>>, %arg10: memref<8x256xf32, #tpu.memory_space<vmem>>) attributes {dimension_semantics = [#tpu.dimension_semantics<parallel>], iteration_bounds = array<i64: 1>, scalar_prefetch = 0 : i64, scratch_operands = 0 : i64, tpu.core_type = #tpu.core_type<tc>, window_params = [{transform_indices = @transform_0, window_bounds = array<i64: 8, 128>}, {pipeline_mode = #tpu.pipeline_mode<synchronous>, transform_indices = @transform_1, window_bounds = array<i64: 128, 128>}, {pipeline_mode = #tpu.pipeline_mode<synchronous>, transform_indices = @transform_2, window_bounds = array<i64: 1, 128>}, {pipeline_mode = #tpu.pipeline_mode<synchronous>, transform_indices = @transform_3, window_bounds = array<i64: 128, 128>}, {pipeline_mode = #tpu.pipeline_mode<synchronous>, transform_indices = @transform_4, window_bounds = array<i64: 1, 128>}, {pipeline_mode = #tpu.pipeline_mode<synchronous>, transform_indices = @transform_5, window_bounds = array<i64: 128, 128>}, {pipeline_mode = #tpu.pipeline_mode<synchronous>, transform_indices = @transform_6, window_bounds = array<i64: 1, 128>}, {pipeline_mode = #tpu.pipeline_mode<synchronous>, transform_indices = @transform_7, window_bounds = array<i64: 128, 256>}, {pipeline_mode = #tpu.pipeline_mode<synchronous>, transform_indices = @transform_8, window_bounds = array<i64: 1, 256>}, {transform_indices = @transform_9, window_bounds = array<i64: 8, 256>}]} {
    %c0 = arith.constant 0 : index
    %c0_0 = arith.constant 0 : index
    %0 = vector.load %arg1[%c0, %c0_0] : memref<8x128xf32, #tpu.memory_space<vmem>>, vector<8x128xf32>
    %c0_1 = arith.constant 0 : index
    %c0_2 = arith.constant 0 : index
    %1 = vector.load %arg2[%c0_1, %c0_2] : memref<128x128xf32, #tpu.memory_space<vmem>>, vector<128x128xf32>
    %cst = arith.constant dense<0.000000e+00> : vector<8x128xf32>
    %2 = tpu.matmul %0, %1, %cst {dimension_numbers = #tpu.dot_dimension_numbers<[1], [0], [0], [1], [0, 0, 1, 1], [], []>} : vector<8x128xf32>, vector<128x128xf32>, vector<8x128xf32> -> vector<8x128xf32>
    %c0_3 = arith.constant 0 : index
    %c0_4 = arith.constant 0 : index
    %3 = vector.load %arg3[%c0_3, %c0_4] : memref<1x128xf32, #tpu.memory_space<vmem>>, vector<1x128xf32>
    %4 = vector.broadcast %3 : vector<1x128xf32> to vector<8x128xf32>
    %5 = arith.addf %2, %4 : vector<8x128xf32>
    %cst_5 = arith.constant 0.000000e+00 : f32
    %6 = vector.broadcast %cst_5 : f32 to vector<8x128xf32>
    %7 = arith.cmpf ogt, %5, %6 : vector<8x128xf32>
    %cst_6 = arith.constant 0.00999999977 : f32
    %8 = vector.broadcast %cst_6 : f32 to vector<8x128xf32>
    %9 = arith.mulf %8, %5 : vector<8x128xf32>
    %10 = arith.select %7, %5, %9 : vector<8x128xi1>, vector<8x128xf32>
    %c0_7 = arith.constant 0 : index
    %c0_8 = arith.constant 0 : index
    %11 = vector.load %arg4[%c0_7, %c0_8] : memref<128x128xf32, #tpu.memory_space<vmem>>, vector<128x128xf32>
    %cst_9 = arith.constant dense<0.000000e+00> : vector<8x128xf32>
    %12 = tpu.matmul %10, %11, %cst_9 {dimension_numbers = #tpu.dot_dimension_numbers<[1], [0], [0], [1], [0, 0, 1, 1], [], []>} : vector<8x128xf32>, vector<128x128xf32>, vector<8x128xf32> -> vector<8x128xf32>
    %c0_10 = arith.constant 0 : index
    %c0_11 = arith.constant 0 : index
    %13 = vector.load %arg5[%c0_10, %c0_11] : memref<1x128xf32, #tpu.memory_space<vmem>>, vector<1x128xf32>
    %14 = vector.broadcast %13 : vector<1x128xf32> to vector<8x128xf32>
    %15 = arith.addf %12, %14 : vector<8x128xf32>
    %cst_12 = arith.constant 0.000000e+00 : f32
    %16 = vector.broadcast %cst_12 : f32 to vector<8x128xf32>
    %17 = arith.cmpf ogt, %15, %16 : vector<8x128xf32>
    %cst_13 = arith.constant 0.00999999977 : f32
    %18 = vector.broadcast %cst_13 : f32 to vector<8x128xf32>
    %19 = arith.mulf %18, %15 : vector<8x128xf32>
    %20 = arith.select %17, %15, %19 : vector<8x128xi1>, vector<8x128xf32>
    %c0_14 = arith.constant 0 : index
    %c0_15 = arith.constant 0 : index
    %21 = vector.load %arg6[%c0_14, %c0_15] : memref<128x128xf32, #tpu.memory_space<vmem>>, vector<128x128xf32>
    %cst_16 = arith.constant dense<0.000000e+00> : vector<8x128xf32>
    %22 = tpu.matmul %20, %21, %cst_16 {dimension_numbers = #tpu.dot_dimension_numbers<[1], [0], [0], [1], [0, 0, 1, 1], [], []>} : vector<8x128xf32>, vector<128x128xf32>, vector<8x128xf32> -> vector<8x128xf32>
    %c0_17 = arith.constant 0 : index
    %c0_18 = arith.constant 0 : index
    %23 = vector.load %arg7[%c0_17, %c0_18] : memref<1x128xf32, #tpu.memory_space<vmem>>, vector<1x128xf32>
    %24 = vector.broadcast %23 : vector<1x128xf32> to vector<8x128xf32>
    %25 = arith.addf %22, %24 : vector<8x128xf32>
    %cst_19 = arith.constant 0.000000e+00 : f32
    %26 = vector.broadcast %cst_19 : f32 to vector<8x128xf32>
    %27 = arith.cmpf ogt, %25, %26 : vector<8x128xf32>
    %cst_20 = arith.constant 0.00999999977 : f32
    %28 = vector.broadcast %cst_20 : f32 to vector<8x128xf32>
    %29 = arith.mulf %28, %25 : vector<8x128xf32>
    %30 = arith.select %27, %25, %29 : vector<8x128xi1>, vector<8x128xf32>
    %c0_21 = arith.constant 0 : index
    %c0_22 = arith.constant 0 : index
    %31 = vector.load %arg8[%c0_21, %c0_22] : memref<128x256xf32, #tpu.memory_space<vmem>>, vector<128x256xf32>
    %cst_23 = arith.constant dense<0.000000e+00> : vector<8x256xf32>
    %32 = tpu.matmul %30, %31, %cst_23 {dimension_numbers = #tpu.dot_dimension_numbers<[1], [0], [0], [1], [0, 0, 1, 1], [], []>} : vector<8x128xf32>, vector<128x256xf32>, vector<8x256xf32> -> vector<8x256xf32>
    %c0_24 = arith.constant 0 : index
    %c0_25 = arith.constant 0 : index
    %33 = vector.load %arg9[%c0_24, %c0_25] : memref<1x256xf32, #tpu.memory_space<vmem>>, vector<1x256xf32>
    %34 = vector.broadcast %33 : vector<1x256xf32> to vector<8x256xf32>
    %35 = arith.addf %32, %34 : vector<8x256xf32>
    %c0_26 = arith.constant 0 : index
    %c0_27 = arith.constant 0 : index
    %36 = vector.load %arg10[%c0_26, %c0_27] : memref<8x256xf32, #tpu.memory_space<vmem>>, vector<8x256xf32>
    tpu.vector_store %arg10[%c0_26, %c0_27], %35 {strides = array<i32>} : memref<8x256xf32, #tpu.memory_space<vmem>>, vector<8x256xf32>,
    return
  }
  func.func @transform_0(%arg0: i32) -> (i32, i32) {
    %c0_i32 = arith.constant 0 : i32
    %c0_i32_0 = arith.constant 0 : i32
    return %arg0, %c0_i32 : i32, i32
  }
  func.func @transform_1(%arg0: i32) -> (i32, i32) {
    %c0_i32 = arith.constant 0 : i32
    %c0_i32_0 = arith.constant 0 : i32
    %c0_i32_1 = arith.constant 0 : i32
    return %c0_i32, %c0_i32_0 : i32, i32
  }
  func.func @transform_2(%arg0: i32) -> (i32, i32) {
    %c0_i32 = arith.constant 0 : i32
    %c0_i32_0 = arith.constant 0 : i32
    %c0_i32_1 = arith.constant 0 : i32
    return %c0_i32, %c0_i32_0 : i32, i32
  }
  func.func @transform_3(%arg0: i32) -> (i32, i32) {
    %c0_i32 = arith.constant 0 : i32
    %c0_i32_0 = arith.constant 0 : i32
    %c0_i32_1 = arith.constant 0 : i32
    return %c0_i32, %c0_i32_0 : i32, i32
  }
  func.func @transform_4(%arg0: i32) -> (i32, i32) {
    %c0_i32 = arith.constant 0 : i32
    %c0_i32_0 = arith.constant 0 : i32
    %c0_i32_1 = arith.constant 0 : i32
    return %c0_i32, %c0_i32_0 : i32, i32
  }
  func.func @transform_5(%arg0: i32) -> (i32, i32) {
    %c0_i32 = arith.constant 0 : i32
    %c0_i32_0 = arith.constant 0 : i32
    %c0_i32_1 = arith.constant 0 : i32
    return %c0_i32, %c0_i32_0 : i32, i32
  }
  func.func @transform_6(%arg0: i32) -> (i32, i32) {
    %c0_i32 = arith.constant 0 : i32
    %c0_i32_0 = arith.constant 0 : i32
    %c0_i32_1 = arith.constant 0 : i32
    return %c0_i32, %c0_i32_0 : i32, i32
  }
  func.func @transform_7(%arg0: i32) -> (i32, i32) {
    %c0_i32 = arith.constant 0 : i32
    %c0_i32_0 = arith.constant 0 : i32
    %c0_i32_1 = arith.constant 0 : i32
    return %c0_i32, %c0_i32_0 : i32, i32
  }
  func.func @transform_8(%arg0: i32) -> (i32, i32) {
    %c0_i32 = arith.constant 0 : i32
    %c0_i32_0 = arith.constant 0 : i32
    %c0_i32_1 = arith.constant 0 : i32
    return %c0_i32, %c0_i32_0 : i32, i32
  }
  func.func @transform_9(%arg0: i32) -> (i32, i32) {
    %c0_i32 = arith.constant 0 : i32
    %c0_i32_0 = arith.constant 0 : i32
    return %arg0, %c0_i32 : i32, i32
  }
}

</mosaic_0001>

<llo_original>
// kernel: tpu_custom_call.1
$region0: #{tpu_custom_call.1}
  #allocation0 [shape = 'u32[]', space=smem, size = 0x4, offset = 0x4, fixed_abs, tag = 'smem constant byte address 0x4 - core index']
  #allocation1 [shape = 'u32[144,128]{1,0:T(1,128)}', space=vmem, size = 0x12000, scoped, tag = 'internal scratch']
  %s0 = inlined_call_operand.hbm [shape: f32[8,128], index: 0, kind: input, shape index: {}]
  %s1 = inlined_call_operand.hbm [shape: f32[128,128], index: 1, kind: input, shape index: {}]
  %s2 = inlined_call_operand.vmem [shape: f32[1,128], index: 2, kind: input, shape index: {}]
  %s3 = inlined_call_operand.hbm [shape: f32[128,128], index: 3, kind: input, shape index: {}]
  %s4 = inlined_call_operand.vmem [shape: f32[1,128], index: 4, kind: input, shape index: {}]
  %s5 = inlined_call_operand.hbm [shape: f32[128,128], index: 5, kind: input, shape index: {}]
  %s6 = inlined_call_operand.vmem [shape: f32[1,128], index: 6, kind: input, shape index: {}]
  %s7 = inlined_call_operand.hbm [shape: f32[128,256], index: 7, kind: input, shape index: {}]
  %s8 = inlined_call_operand.vmem [shape: f32[1,256], index: 8, kind: input, shape index: {}]
  %s9 = inlined_call_operand.hbm [shape: f32[8,256], index: 9, kind: output, shape index: {}]
  %s10 = sld [smem:[#allocation0]]
  $region66: #{tpu_custom_call.1} parent=0
    _
  %s12 = ssub.s32 1, %s10
  %s13 = scalar_select 0, %s12, %s10
  $region1: #{tpu_custom_call.1} parent=0
    #allocation2 [shape = 'u8[4096]{0}', space=vmem, size = 0x1000, scoped, tag = 'input window, operand 0, single buffered']
    #allocation3 [shape = 's32[1]{0}', space=sflag, size = 0x4, scoped, tag = 'scoped memory for tpu_custom_call.1']
    #allocation4 [shape = 's32[1]{0}', space=sflag, size = 0x4, scoped, tag = 'scoped memory for tpu_custom_call.1']
    #allocation5 [shape = 'u8[65536]{0}', space=vmem, size = 0x10000, scoped, tag = 'input window, operand 1, single buffered']
    #allocation6 [shape = 's32[1]{0}', space=sflag, size = 0x4, scoped, tag = 'scoped memory for tpu_custom_call.1']
    #allocation7 [shape = 'u8[65536]{0}', space=vmem, size = 0x10000, scoped, tag = 'input window, operand 3, single buffered']
    #allocation8 [shape = 'u8[65536]{0}', space=vmem, size = 0x10000, scoped, tag = 'input window, operand 5, single buffered']
    #allocation9 [shape = 's32[1]{0}', space=sflag, size = 0x4, scoped, tag = 'scoped memory for tpu_custom_call.1']
    #allocation10 [shape = 'u8[131072]{0}', space=vmem, size = 0x20000, scoped, tag = 'input window, operand 7, single buffered']
    #allocation11 [shape = 'u8[8192]{0}', space=vmem, size = 0x2000, scoped, tag = 'output window, operand 0, single buffered']
    %14 = vsyncpa [#allocation3], 0
    %15 = vsyncpa [#allocation6], 0
    %16 = vsyncpa [#allocation9], 0
    %17 = vsyncpa [#allocation4], 0
    // Predicated region
    $region2: #{tpu_custom_call.1} parent=1 // pred_check
      _
    $region3: #{tpu_custom_call.1} parent=1 // pred_check_branch
      %19 = sbr.rel (0) target = $region5
    $region4: #{tpu_custom_call.1} parent=1 // pred_region
      %s21 = ssub.s32 128, 128
      %22 = vsyncadd [#allocation3], %s21
      %s24 = sshll.u32 [#allocation2], 4
      %s25 = int_to_ptr.vmem [resolvable:$true] %s24
      %27 = dma.hbm_to_vmem [thread:$0]  %s0, 128, %s25, [#allocation3]
    $region5: #{tpu_custom_call.1} parent=1 // pred_fallthru
      _
    // Predicated region
    $region6: #{tpu_custom_call.1} parent=1 // pred_check
      _
    $region7: #{tpu_custom_call.1} parent=1 // pred_check_branch
      %29 = sbr.rel (0) target = $region9
    $region8: #{tpu_custom_call.1} parent=1 // pred_region
      %s31 = ssub.s32 2048, 2048
      %32 = vsyncadd [#allocation6], %s31
      %s33 = sshll.u32 [#allocation5], 4
      %s34 = int_to_ptr.vmem [resolvable:$true] %s33
      %39 = dma.hbm_to_vmem [thread:$0]  %s1, 2048, %s34, [#allocation6], 128, 128, 8
    $region9: #{tpu_custom_call.1} parent=1 // pred_fallthru
      _
    // Predicated region
    $region10: #{tpu_custom_call.1} parent=1 // pred_check
      _
    $region11: #{tpu_custom_call.1} parent=1 // pred_check_branch
      %41 = sbr.rel (0) target = $region13
    $region12: #{tpu_custom_call.1} parent=1 // pred_region
      _
    $region13: #{tpu_custom_call.1} parent=1 // pred_fallthru
      _
    // Predicated region
    $region14: #{tpu_custom_call.1} parent=1 // pred_check
      _
    $region15: #{tpu_custom_call.1} parent=1 // pred_check_branch
      %43 = sbr.rel (0) target = $region17
    $region16: #{tpu_custom_call.1} parent=1 // pred_region
      %s45 = ssub.s32 2048, 2048
      %46 = vsyncadd [#allocation6], %s45
      %s47 = sshll.u32 [#allocation7], 4
      %s48 = int_to_ptr.vmem [resolvable:$true] %s47
      %53 = dma.hbm_to_vmem [thread:$0]  %s3, 2048, %s48, [#allocation6], 128, 128, 8
    $region17: #{tpu_custom_call.1} parent=1 // pred_fallthru
      _
    // Predicated region
    $region18: #{tpu_custom_call.1} parent=1 // pred_check
      _
    $region19: #{tpu_custom_call.1} parent=1 // pred_check_branch
      %55 = sbr.rel (0) target = $region21
    $region20: #{tpu_custom_call.1} parent=1 // pred_region
      _
    $region21: #{tpu_custom_call.1} parent=1 // pred_fallthru
      _
    // Predicated region
    $region22: #{tpu_custom_call.1} parent=1 // pred_check
      _
    $region23: #{tpu_custom_call.1} parent=1 // pred_check_branch
      %57 = sbr.rel (0) target = $region25
    $region24: #{tpu_custom_call.1} parent=1 // pred_region
      %s59 = ssub.s32 2048, 2048
      %60 = vsyncadd [#allocation9], %s59
      %s61 = sshll.u32 [#allocation8], 4
      %s62 = int_to_ptr.vmem [resolvable:$true] %s61
      %67 = dma.hbm_to_vmem [thread:$0]  %s5, 2048, %s62, [#allocation9], 128, 128, 8
    $region25: #{tpu_custom_call.1} parent=1 // pred_fallthru
      _
    // Predicated region
    $region26: #{tpu_custom_call.1} parent=1 // pred_check
      _
    $region27: #{tpu_custom_call.1} parent=1 // pred_check_branch
      %69 = sbr.rel (0) target = $region29
    $region28: #{tpu_custom_call.1} parent=1 // pred_region
      _
    $region29: #{tpu_custom_call.1} parent=1 // pred_fallthru
      _
    // Predicated region
    $region30: #{tpu_custom_call.1} parent=1 // pred_check
      _
    $region31: #{tpu_custom_call.1} parent=1 // pred_check_branch
      %71 = sbr.rel (0) target = $region33
    $region32: #{tpu_custom_call.1} parent=1 // pred_region
      %s73 = ssub.s32 4096, 4096
      %74 = vsyncadd [#allocation9], %s73
      %s75 = sshll.u32 [#allocation10], 4
      %s76 = int_to_ptr.vmem [resolvable:$true] %s75
      %81 = dma.hbm_to_vmem [thread:$0]  %s7, 4096, %s76, [#allocation9], 256, 256, 16
    $region33: #{tpu_custom_call.1} parent=1 // pred_fallthru
      _
    // Predicated region
    $region34: #{tpu_custom_call.1} parent=1 // pred_check
      _
    $region35: #{tpu_custom_call.1} parent=1 // pred_check_branch
      %83 = sbr.rel (0) target = $region37
    $region36: #{tpu_custom_call.1} parent=1 // pred_region
      _
    $region37: #{tpu_custom_call.1} parent=1 // pred_fallthru
      _
    // Predicated region
    $region38: #{tpu_custom_call.1} parent=1 // pred_check
      _
    $region39: #{tpu_custom_call.1} parent=1 // pred_check_branch
      %85 = sbr.rel (0) target = $region41
    $region40: #{tpu_custom_call.1} parent=1 // pred_region
      %86 = dma.done [#allocation3], 128
    $region41: #{tpu_custom_call.1} parent=1 // pred_fallthru
      _
    // Predicated region
    $region42: #{tpu_custom_call.1} parent=1 // pred_check
      _
    $region43: #{tpu_custom_call.1} parent=1 // pred_check_branch
      %88 = sbr.rel (0) target = $region45
    $region44: #{tpu_custom_call.1} parent=1 // pred_region
      %89 = dma.done [#allocation6], 2048
    $region45: #{tpu_custom_call.1} parent=1 // pred_fallthru
      _
    // Predicated region
    $region46: #{tpu_custom_call.1} parent=1 // pred_check
      _
    $region47: #{tpu_custom_call.1} parent=1 // pred_check_branch
      %91 = sbr.rel (0) target = $region49
    $region48: #{tpu_custom_call.1} parent=1 // pred_region
      %92 = dma.done [#allocation6], 2048
    $region49: #{tpu_custom_call.1} parent=1 // pred_fallthru
      _
    // Predicated region
    $region50: #{tpu_custom_call.1} parent=1 // pred_check
      _
    $region51: #{tpu_custom_call.1} parent=1 // pred_check_branch
      %94 = sbr.rel (0) target = $region53
    $region52: #{tpu_custom_call.1} parent=1 // pred_region
      %95 = dma.done [#allocation9], 2048
    $region53: #{tpu_custom_call.1} parent=1 // pred_fallthru
      _
    // Predicated region
    $region54: #{tpu_custom_call.1} parent=1 // pred_check
      _
    $region55: #{tpu_custom_call.1} parent=1 // pred_check_branch
      %97 = sbr.rel (0) target = $region57
    $region56: #{tpu_custom_call.1} parent=1 // pred_region
      %98 = dma.done [#allocation9], 4096
    $region57: #{tpu_custom_call.1} parent=1 // pred_fallthru
      _
    %v99 = vld [vmem:[#allocation2] sm:$0xff]
    %v100 = vld [vmem:[#allocation5] sm:$0xff]
    %v101 = vld [vmem:[#allocation5 + $0x8] sm:$0xff]
    %v102 = vld [vmem:[#allocation5 + $0x10] sm:$0xff]
    %v103 = vld [vmem:[#allocation5 + $0x18] sm:$0xff]
    %v104 = vld [vmem:[#allocation5 + $0x20] sm:$0xff]
    %v105 = vld [vmem:[#allocation5 + $0x28] sm:$0xff]
    %v106 = vld [vmem:[#allocation5 + $0x30] sm:$0xff]
    %v107 = vld [vmem:[#allocation5 + $0x38] sm:$0xff]
    %v108 = vld [vmem:[#allocation5 + $0x40] sm:$0xff]
    %v109 = vld [vmem:[#allocation5 + $0x48] sm:$0xff]
    %v110 = vld [vmem:[#allocation5 + $0x50] sm:$0xff]
    %v111 = vld [vmem:[#allocation5 + $0x58] sm:$0xff]
    %v112 = vld [vmem:[#allocation5 + $0x60] sm:$0xff]
    %v113 = vld [vmem:[#allocation5 + $0x68] sm:$0xff]
    %v114 = vld [vmem:[#allocation5 + $0x70] sm:$0xff]
    %v115 = vld [vmem:[#allocation5 + $0x78] sm:$0xff]
    %v116 = vld [vmem:[%s2] sm:$0x1]
    %v118 = vlaneseq
    %v119 = vshrl.u32 %v118, 7
    %v120 = vsub.s32 0, %v119
    %v121 = vrot.slane %v116, %v120
    %123 = vmatprep.subr.mxu0 0.0
    %124 = vmatpush1.msra.mxu0 %v115
    %125 = vmatprep.subr.mxu0 0.0
    %126 = vmatpush1.msra.mxu0 %v114
    %127 = vmatprep.subr.mxu0 0.0
    %128 = vmatpush1.msra.mxu0 %v113
    %129 = vmatprep.subr.mxu0 0.0
    %130 = vmatpush1.msra.mxu0 %v112
    %131 = vmatprep.subr.mxu0 0.0
    %132 = vmatpush1.msra.mxu0 %v111
    %133 = vmatprep.subr.mxu0 0.0
    %134 = vmatpush1.msra.mxu0 %v110
    %135 = vmatprep.subr.mxu0 0.0
    %136 = vmatpush1.msra.mxu0 %v109
    %137 = vmatprep.subr.mxu0 0.0
    %138 = vmatpush1.msra.mxu0 %v108
    %139 = vmatprep.subr.mxu0 0.0
    %140 = vmatpush1.msra.mxu0 %v107
    %141 = vmatprep.subr.mxu0 0.0
    %142 = vmatpush1.msra.mxu0 %v106
    %143 = vmatprep.subr.mxu0 0.0
    %144 = vmatpush1.msra.mxu0 %v105
    %145 = vmatprep.subr.mxu0 0.0
    %146 = vmatpush1.msra.mxu0 %v104
    %147 = vmatprep.subr.mxu0 0.0
    %148 = vmatpush1.msra.mxu0 %v103
    %149 = vmatprep.subr.mxu0 0.0
    %150 = vmatpush1.msra.mxu0 %v102
    %151 = vmatprep.subr.mxu0 0.0
    %152 = vmatpush1.msra.mxu0 %v101
    %153 = vmatprep.subr.mxu0 0.0
    %154 = vmatpush1.msra.mxu0 %v100
    %155 = vmatprep.subr.mxu0 0.0
    %156 = vmatpush2.msra.mxu0 0.0
    %157 = vmatprep.subr.mxu0 0.0
    %158 = vmatpush2.msra.mxu0 0.0
    %159 = vmatprep.subr.mxu0 0.0
    %160 = vmatpush2.msra.mxu0 0.0
    %161 = vmatprep.subr.mxu0 0.0
    %162 = vmatpush2.msra.mxu0 0.0
    %163 = vmatprep.subr.mxu0 0.0
    %164 = vmatpush2.msra.mxu0 0.0
    %165 = vmatprep.subr.mxu0 0.0
    %166 = vmatpush2.msra.mxu0 0.0
    %167 = vmatprep.subr.mxu0 0.0
    %168 = vmatpush2.msra.mxu0 0.0
    %169 = vmatprep.subr.mxu0 0.0
    %170 = vmatpush2.msra.mxu0 0.0
    %171 = vmatprep.subr.mxu0 0.0
    %172 = vmatpush2.msra.mxu0 0.0
    %173 = vmatprep.subr.mxu0 0.0
    %174 = vmatpush2.msra.mxu0 0.0
    %175 = vmatprep.subr.mxu0 0.0
    %176 = vmatpush2.msra.mxu0 0.0
    %177 = vmatprep.subr.mxu0 0.0
    %178 = vmatpush2.msra.mxu0 0.0
    %179 = vmatprep.subr.mxu0 0.0
    %180 = vmatpush2.msra.mxu0 0.0
    %181 = vmatprep.subr.mxu0 0.0
    %182 = vmatpush2.msra.mxu0 0.0
    %183 = vmatprep.subr.mxu0 0.0
    %184 = vmatpush2.msra.mxu0 0.0
    %185 = vmatprep.subr.mxu0 0.0
    %186 = vmatpush2.msra.mxu0 0.0
    %187 = vmatprep.mubr.f32.mxu0 0.0
    %188 = vmatmul.mubr.f32.gmra.mxu0 %v99
    %v189 = vpop.f32.mrf.mxu0
    %v190 = vadd.f32 %v121, %v189
    %v191 = vpop.f32.mrf.mxu0
    %192 = vdwg.mxu0
    %vm193 = vcmp.gt.f32.partialorder %v190, 0.0
    %v194 = vmul.f32 %v190, 0.01
    %v195 = vsel %vm193, %v190, %v194
    %v196 = vld [vmem:[#allocation7] sm:$0xff]
    %v197 = vld [vmem:[#allocation7 + $0x8] sm:$0xff]
    %v198 = vld [vmem:[#allocation7 + $0x10] sm:$0xff]
    %v199 = vld [vmem:[#allocation7 + $0x18] sm:$0xff]
    %v200 = vld [vmem:[#allocation7 + $0x20] sm:$0xff]
    %v201 = vld [vmem:[#allocation7 + $0x28] sm:$0xff]
    %v202 = vld [vmem:[#allocation7 + $0x30] sm:$0xff]
    %v203 = vld [vmem:[#allocation7 + $0x38] sm:$0xff]
    %v204 = vld [vmem:[#allocation7 + $0x40] sm:$0xff]
    %v205 = vld [vmem:[#allocation7 + $0x48] sm:$0xff]
    %v206 = vld [vmem:[#allocation7 + $0x50] sm:$0xff]
    %v207 = vld [vmem:[#allocation7 + $0x58] sm:$0xff]
    %v208 = vld [vmem:[#allocation7 + $0x60] sm:$0xff]
    %v209 = vld [vmem:[#allocation7 + $0x68] sm:$0xff]
    %v210 = vld [vmem:[#allocation7 + $0x70] sm:$0xff]
    %v211 = vld [vmem:[#allocation7 + $0x78] sm:$0xff]
    %v212 = vld [vmem:[%s4] sm:$0x1]
    %v214 = vlaneseq
    %v215 = vshrl.u32 %v214, 7
    %v216 = vsub.s32 0, %v215
    %v217 = vrot.slane %v212, %v216
    %219 = vmatprep.subr.mxu0 0.0
    %220 = vmatpush1.msra.mxu0 %v211
    %221 = vmatprep.subr.mxu0 0.0
    %222 = vmatpush1.msra.mxu0 %v210
    %223 = vmatprep.subr.mxu0 0.0
    %224 = vmatpush1.msra.mxu0 %v209
    %225 = vmatprep.subr.mxu0 0.0
    %226 = vmatpush1.msra.mxu0 %v208
    %227 = vmatprep.subr.mxu0 0.0
    %228 = vmatpush1.msra.mxu0 %v207
    %229 = vmatprep.subr.mxu0 0.0
    %230 = vmatpush1.msra.mxu0 %v206
    %231 = vmatprep.subr.mxu0 0.0
    %232 = vmatpush1.msra.mxu0 %v205
    %233 = vmatprep.subr.mxu0 0.0
    %234 = vmatpush1.msra.mxu0 %v204
    %235 = vmatprep.subr.mxu0 0.0
    %236 = vmatpush1.msra.mxu0 %v203
    %237 = vmatprep.subr.mxu0 0.0
    %238 = vmatpush1.msra.mxu0 %v202
    %239 = vmatprep.subr.mxu0 0.0
    %240 = vmatpush1.msra.mxu0 %v201
    %241 = vmatprep.subr.mxu0 0.0
    %242 = vmatpush1.msra.mxu0 %v200
    %243 = vmatprep.subr.mxu0 0.0
    %244 = vmatpush1.msra.mxu0 %v199
    %245 = vmatprep.subr.mxu0 0.0
    %246 = vmatpush1.msra.mxu0 %v198
    %247 = vmatprep.subr.mxu0 0.0
    %248 = vmatpush1.msra.mxu0 %v197
    %249 = vmatprep.subr.mxu0 0.0
    %250 = vmatpush1.msra.mxu0 %v196
    %251 = vmatprep.subr.mxu0 0.0
    %252 = vmatpush2.msra.mxu0 0.0
    %253 = vmatprep.subr.mxu0 0.0
    %254 = vmatpush2.msra.mxu0 0.0
    %255 = vmatprep.subr.mxu0 0.0
    %256 = vmatpush2.msra.mxu0 0.0
    %257 = vmatprep.subr.mxu0 0.0
    %258 = vmatpush2.msra.mxu0 0.0
    %259 = vmatprep.subr.mxu0 0.0
    %260 = vmatpush2.msra.mxu0 0.0
    %261 = vmatprep.subr.mxu0 0.0
    %262 = vmatpush2.msra.mxu0 0.0
    %263 = vmatprep.subr.mxu0 0.0
    %264 = vmatpush2.msra.mxu0 0.0
    %265 = vmatprep.subr.mxu0 0.0
    %266 = vmatpush2.msra.mxu0 0.0
    %267 = vmatprep.subr.mxu0 0.0
    %268 = vmatpush2.msra.mxu0 0.0
    %269 = vmatprep.subr.mxu0 0.0
    %270 = vmatpush2.msra.mxu0 0.0
    %271 = vmatprep.subr.mxu0 0.0
    %272 = vmatpush2.msra.mxu0 0.0
    %273 = vmatprep.subr.mxu0 0.0
    %274 = vmatpush2.msra.mxu0 0.0
    %275 = vmatprep.subr.mxu0 0.0
    %276 = vmatpush2.msra.mxu0 0.0
    %277 = vmatprep.subr.mxu0 0.0
    %278 = vmatpush2.msra.mxu0 0.0
    %279 = vmatprep.subr.mxu0 0.0
    %280 = vmatpush2.msra.mxu0 0.0
    %281 = vmatprep.subr.mxu0 0.0
    %282 = vmatpush2.msra.mxu0 0.0
    %283 = vmatprep.mubr.f32.mxu0 0.0
    %284 = vmatmul.mubr.f32.gmra.mxu0 %v195
    %v285 = vpop.f32.mrf.mxu0
    %v286 = vadd.f32 %v217, %v285
    %v287 = vpop.f32.mrf.mxu0
    %288 = vdwg.mxu0
    %vm289 = vcmp.gt.f32.partialorder %v286, 0.0
    %v290 = vmul.f32 %v286, 0.01
    %v291 = vsel %vm289, %v286, %v290
    %v292 = vld [vmem:[#allocation8] sm:$0xff]
    %v293 = vld [vmem:[#allocation8 + $0x8] sm:$0xff]
    %v294 = vld [vmem:[#allocation8 + $0x10] sm:$0xff]
    %v295 = vld [vmem:[#allocation8 + $0x18] sm:$0xff]
    %v296 = vld [vmem:[#allocation8 + $0x20] sm:$0xff]
    %v297 = vld [vmem:[#allocation8 + $0x28] sm:$0xff]
    %v298 = vld [vmem:[#allocation8 + $0x30] sm:$0xff]
    %v299 = vld [vmem:[#allocation8 + $0x38] sm:$0xff]
    %v300 = vld [vmem:[#allocation8 + $0x40] sm:$0xff]
    %v301 = vld [vmem:[#allocation8 + $0x48] sm:$0xff]
    %v302 = vld [vmem:[#allocation8 + $0x50] sm:$0xff]
    %v303 = vld [vmem:[#allocation8 + $0x58] sm:$0xff]
    %v304 = vld [vmem:[#allocation8 + $0x60] sm:$0xff]
    %v305 = vld [vmem:[#allocation8 + $0x68] sm:$0xff]
    %v306 = vld [vmem:[#allocation8 + $0x70] sm:$0xff]
    %v307 = vld [vmem:[#allocation8 + $0x78] sm:$0xff]
    %v308 = vld [vmem:[%s6] sm:$0x1]
    %v310 = vlaneseq
    %v311 = vshrl.u32 %v310, 7
    %v312 = vsub.s32 0, %v311
    %v313 = vrot.slane %v308, %v312
    %315 = vmatprep.subr.mxu0 0.0
    %316 = vmatpush1.msra.mxu0 %v307
    %317 = vmatprep.subr.mxu0 0.0
    %318 = vmatpush1.msra.mxu0 %v306
    %319 = vmatprep.subr.mxu0 0.0
    %320 = vmatpush1.msra.mxu0 %v305
    %321 = vmatprep.subr.mxu0 0.0
    %322 = vmatpush1.msra.mxu0 %v304
    %323 = vmatprep.subr.mxu0 0.0
    %324 = vmatpush1.msra.mxu0 %v303
    %325 = vmatprep.subr.mxu0 0.0
    %326 = vmatpush1.msra.mxu0 %v302
    %327 = vmatprep.subr.mxu0 0.0
    %328 = vmatpush1.msra.mxu0 %v301
    %329 = vmatprep.subr.mxu0 0.0
    %330 = vmatpush1.msra.mxu0 %v300
    %331 = vmatprep.subr.mxu0 0.0
    %332 = vmatpush1.msra.mxu0 %v299
    %333 = vmatprep.subr.mxu0 0.0
    %334 = vmatpush1.msra.mxu0 %v298
    %335 = vmatprep.subr.mxu0 0.0
    %336 = vmatpush1.msra.mxu0 %v297
    %337 = vmatprep.subr.mxu0 0.0
    %338 = vmatpush1.msra.mxu0 %v296
    %339 = vmatprep.subr.mxu0 0.0
    %340 = vmatpush1.msra.mxu0 %v295
    %341 = vmatprep.subr.mxu0 0.0
    %342 = vmatpush1.msra.mxu0 %v294
    %343 = vmatprep.subr.mxu0 0.0
    %344 = vmatpush1.msra.mxu0 %v293
    %345 = vmatprep.subr.mxu0 0.0
    %346 = vmatpush1.msra.mxu0 %v292
    %347 = vmatprep.subr.mxu0 0.0
    %348 = vmatpush2.msra.mxu0 0.0
    %349 = vmatprep.subr.mxu0 0.0
    %350 = vmatpush2.msra.mxu0 0.0
    %351 = vmatprep.subr.mxu0 0.0
    %352 = vmatpush2.msra.mxu0 0.0
    %353 = vmatprep.subr.mxu0 0.0
    %354 = vmatpush2.msra.mxu0 0.0
    %355 = vmatprep.subr.mxu0 0.0
    %356 = vmatpush2.msra.mxu0 0.0
    %357 = vmatprep.subr.mxu0 0.0
    %358 = vmatpush2.msra.mxu0 0.0
    %359 = vmatprep.subr.mxu0 0.0
    %360 = vmatpush2.msra.mxu0 0.0
    %361 = vmatprep.subr.mxu0 0.0
    %362 = vmatpush2.msra.mxu0 0.0
    %363 = vmatprep.subr.mxu0 0.0
    %364 = vmatpush2.msra.mxu0 0.0
    %365 = vmatprep.subr.mxu0 0.0
    %366 = vmatpush2.msra.mxu0 0.0
    %367 = vmatprep.subr.mxu0 0.0
    %368 = vmatpush2.msra.mxu0 0.0
    %369 = vmatprep.subr.mxu0 0.0
    %370 = vmatpush2.msra.mxu0 0.0
    %371 = vmatprep.subr.mxu0 0.0
    %372 = vmatpush2.msra.mxu0 0.0
    %373 = vmatprep.subr.mxu0 0.0
    %374 = vmatpush2.msra.mxu0 0.0
    %375 = vmatprep.subr.mxu0 0.0
    %376 = vmatpush2.msra.mxu0 0.0
    %377 = vmatprep.subr.mxu0 0.0
    %378 = vmatpush2.msra.mxu0 0.0
    %379 = vmatprep.mubr.f32.mxu0 0.0
    %380 = vmatmul.mubr.f32.gmra.mxu0 %v291
    %v381 = vpop.f32.mrf.mxu0
    %v382 = vadd.f32 %v313, %v381
    %v383 = vpop.f32.mrf.mxu0
    %384 = vdwg.mxu0
    %vm385 = vcmp.gt.f32.partialorder %v382, 0.0
    %v386 = vmul.f32 %v382, 0.01
    %v387 = vsel %vm385, %v382, %v386
    %v388 = vld [vmem:[#allocation10] sm:$0xff]
    %v389 = vld [vmem:[#allocation10 + $0x8] sm:$0xff]
    %v390 = vld [vmem:[#allocation10 + $0x10] sm:$0xff]
    %v391 = vld [vmem:[#allocation10 + $0x18] sm:$0xff]
    %v392 = vld [vmem:[#allocation10 + $0x20] sm:$0xff]
    %v393 = vld [vmem:[#allocation10 + $0x28] sm:$0xff]
    %v394 = vld [vmem:[#allocation10 + $0x30] sm:$0xff]
    %v395 = vld [vmem:[#allocation10 + $0x38] sm:$0xff]
    %v396 = vld [vmem:[#allocation10 + $0x40] sm:$0xff]
    %v397 = vld [vmem:[#allocation10 + $0x48] sm:$0xff]
    %v398 = vld [vmem:[#allocation10 + $0x50] sm:$0xff]
    %v399 = vld [vmem:[#allocation10 + $0x58] sm:$0xff]
    %v400 = vld [vmem:[#allocation10 + $0x60] sm:$0xff]
    %v401 = vld [vmem:[#allocation10 + $0x68] sm:$0xff]
    %v402 = vld [vmem:[#allocation10 + $0x70] sm:$0xff]
    %v403 = vld [vmem:[#allocation10 + $0x78] sm:$0xff]
    %v404 = vld [vmem:[#allocation10 + $0x80] sm:$0xff]
    %v405 = vld [vmem:[#allocation10 + $0x88] sm:$0xff]
    %v406 = vld [vmem:[#allocation10 + $0x90] sm:$0xff]
    %v407 = vld [vmem:[#allocation10 + $0x98] sm:$0xff]
    %v408 = vld [vmem:[#allocation10 + $0xa0] sm:$0xff]
    %v409 = vld [vmem:[#allocation10 + $0xa8] sm:$0xff]
    %v410 = vld [vmem:[#allocation10 + $0xb0] sm:$0xff]
    %v411 = vld [vmem:[#allocation10 + $0xb8] sm:$0xff]
    %v412 = vld [vmem:[#allocation10 + $0xc0] sm:$0xff]
    %v413 = vld [vmem:[#allocation10 + $0xc8] sm:$0xff]
    %v414 = vld [vmem:[#allocation10 + $0xd0] sm:$0xff]
    %v415 = vld [vmem:[#allocation10 + $0xd8] sm:$0xff]
    %v416 = vld [vmem:[#allocation10 + $0xe0] sm:$0xff]
    %v417 = vld [vmem:[#allocation10 + $0xe8] sm:$0xff]
    %v418 = vld [vmem:[#allocation10 + $0xf0] sm:$0xff]
    %v419 = vld [vmem:[#allocation10 + $0xf8] sm:$0xff]
    %v420 = vld [vmem:[%s8] sm:$0x3]
    %v422 = vlaneseq
    %v423 = vshrl.u32 %v422, 7
    %v424 = vsub.s32 0, %v423
    %v425 = vrot.slane %v420, %v424
    %v426 = vlaneseq
    %v427 = vshrl.u32 %v426, 7
    %v428 = vsub.s32 1, %v427
    %v429 = vrot.slane %v420, %v428
    %432 = vmatprep.subr.mxu0 %v419
    %433 = vmatpush1.msra.mxu0 %v418
    %434 = vmatprep.subr.mxu0 %v417
    %435 = vmatpush1.msra.mxu0 %v416
    %436 = vmatprep.subr.mxu0 %v415
    %437 = vmatpush1.msra.mxu0 %v414
    %438 = vmatprep.subr.mxu0 %v413
    %439 = vmatpush1.msra.mxu0 %v412
    %440 = vmatprep.subr.mxu0 %v411
    %441 = vmatpush1.msra.mxu0 %v410
    %442 = vmatprep.subr.mxu0 %v409
    %443 = vmatpush1.msra.mxu0 %v408
    %444 = vmatprep.subr.mxu0 %v407
    %445 = vmatpush1.msra.mxu0 %v406
    %446 = vmatprep.subr.mxu0 %v405
    %447 = vmatpush1.msra.mxu0 %v404
    %448 = vmatprep.subr.mxu0 %v403
    %449 = vmatpush1.msra.mxu0 %v402
    %450 = vmatprep.subr.mxu0 %v401
    %451 = vmatpush1.msra.mxu0 %v400
    %452 = vmatprep.subr.mxu0 %v399
    %453 = vmatpush1.msra.mxu0 %v398
    %454 = vmatprep.subr.mxu0 %v397
    %455 = vmatpush1.msra.mxu0 %v396
    %456 = vmatprep.subr.mxu0 %v395
    %457 = vmatpush1.msra.mxu0 %v394
    %458 = vmatprep.subr.mxu0 %v393
    %459 = vmatpush1.msra.mxu0 %v392
    %460 = vmatprep.subr.mxu0 %v391
    %461 = vmatpush1.msra.mxu0 %v390
    %462 = vmatprep.subr.mxu0 %v389
    %463 = vmatpush1.msra.mxu0 %v388
    %464 = vmatprep.subr.mxu0 0.0
    %465 = vmatpush2.msra.mxu0 0.0
    %466 = vmatprep.subr.mxu0 0.0
    %467 = vmatpush2.msra.mxu0 0.0
    %468 = vmatprep.subr.mxu0 0.0
    %469 = vmatpush2.msra.mxu0 0.0
    %470 = vmatprep.subr.mxu0 0.0
    %471 = vmatpush2.msra.mxu0 0.0
    %472 = vmatprep.subr.mxu0 0.0
    %473 = vmatpush2.msra.mxu0 0.0
    %474 = vmatprep.subr.mxu0 0.0
    %475 = vmatpush2.msra.mxu0 0.0
    %476 = vmatprep.subr.mxu0 0.0
    %477 = vmatpush2.msra.mxu0 0.0
    %478 = vmatprep.subr.mxu0 0.0
    %479 = vmatpush2.msra.mxu0 0.0
    %480 = vmatprep.subr.mxu0 0.0
    %481 = vmatpush2.msra.mxu0 0.0
    %482 = vmatprep.subr.mxu0 0.0
    %483 = vmatpush2.msra.mxu0 0.0
    %484 = vmatprep.subr.mxu0 0.0
    %485 = vmatpush2.msra.mxu0 0.0
    %486 = vmatprep.subr.mxu0 0.0
    %487 = vmatpush2.msra.mxu0 0.0
    %488 = vmatprep.subr.mxu0 0.0
    %489 = vmatpush2.msra.mxu0 0.0
    %490 = vmatprep.subr.mxu0 0.0
    %491 = vmatpush2.msra.mxu0 0.0
    %492 = vmatprep.subr.mxu0 0.0
    %493 = vmatpush2.msra.mxu0 0.0
    %494 = vmatprep.subr.mxu0 0.0
    %495 = vmatpush2.msra.mxu0 0.0
    %496 = vmatprep.mubr.f32.mxu0 0.0
    %497 = vmatmul.mubr.f32.gmra.mxu0 %v387
    %v498 = vpop.f32.mrf.mxu0
    %v499 = vadd.f32 %v425, %v498
    %v500 = vpop.f32.mrf.mxu0
    %v501 = vadd.f32 %v429, %v500
    %502 = vdwg.mxu0
    %503 = vst [vmem:[#allocation11] sm:$0xff] %v499
    %504 = vst [vmem:[#allocation11 + $0x8] sm:$0xff] %v501
    // Predicated region
    $region58: #{tpu_custom_call.1} parent=1 // pred_check
      _
    $region59: #{tpu_custom_call.1} parent=1 // pred_check_branch
      %506 = sbr.rel (0) target = $region61
    $region60: #{tpu_custom_call.1} parent=1 // pred_region
      %s508 = ssub.s32 256, 256
      %509 = vsyncadd [#allocation4], %s508
      %s511 = sshll.u32 [#allocation11], 4
      %s512 = int_to_ptr.vmem [resolvable:$true] %s511
      %514 = dma.vmem_to_hbm [thread:$0]  %s512, 256, %s9, [#allocation4]
    $region61: #{tpu_custom_call.1} parent=1 // pred_fallthru
      _
    // Predicated region
    $region62: #{tpu_custom_call.1} parent=1 // pred_check
      _
    $region63: #{tpu_custom_call.1} parent=1 // pred_check_branch
      %516 = sbr.rel (0) target = $region65
    $region64: #{tpu_custom_call.1} parent=1 // pred_region
      %517 = dma.done [#allocation4], 256
    $region65: #{tpu_custom_call.1} parent=1 // pred_fallthru
      _
    %518 = vsyncpa [#allocation3], 1
    %519 = vsyncpa [#allocation6], 1
    %520 = vsyncpa [#allocation9], 1
    %521 = vsyncpa [#allocation4], 1

</llo_original>
